<compile_context>
chip_gen: v7x
topology: tpu7x:2x2x1
jax: 0.10.0
libtpu: 0.0.40
codegen_flags: <defaults>
</compile_context>

<pallas_src>
import jax
import jax.numpy as jnp
from jax.experimental import pallas as pl
from jax.experimental.pallas import tpu as pltpu


def _round_up(n, m):
    return ((n + m - 1) // m) * m


def mlp_kernel(x_ref, w1_ref, b1_ref, w2_ref, b2_ref, w3_ref, b3_ref, w4_ref, b4_ref, o_ref):
    # fc1 + ReLU  (bf16 operands, f32 accumulation; in-kernel cast hides under MXU work)
    x = x_ref[...].astype(jnp.bfloat16)
    h = jnp.dot(x, w1_ref[...], preferred_element_type=jnp.float32) + b1_ref[...]
    h = jnp.maximum(h, 0.0)

    # fc2 + ReLU
    h = jnp.dot(h.astype(jnp.bfloat16), w2_ref[...],
                preferred_element_type=jnp.float32) + b2_ref[...]
    h = jnp.maximum(h, 0.0)

    # fc3 + ReLU
    h = jnp.dot(h.astype(jnp.bfloat16), w3_ref[...],
                preferred_element_type=jnp.float32) + b3_ref[...]
    h = jnp.maximum(h, 0.0)

    # fc4 (6x6, no activation) on the VPU: 6 broadcast-FMA partials, tree-summed.
    # Avoids a 4th MXU push (lane-sparse 6-wide matmul) and avoids a 6-deep serial chain.
    w4 = w4_ref[...]                                     # (6, 6) f32
    p0 = h[:, 0:1] * w4[0:1, :]
    p1 = h[:, 1:2] * w4[1:2, :]
    p2 = h[:, 2:3] * w4[2:3, :]
    p3 = h[:, 3:4] * w4[3:4, :]
    p4 = h[:, 4:5] * w4[4:5, :]
    p5 = h[:, 5:6] * w4[5:6, :]
    acc = ((p0 + p1) + (p2 + p3)) + ((p4 + p5) + b4_ref[...])   # (tb, 6)
    o_ref[...] = acc.astype(o_ref.dtype)


def _const_spec(shape):
    # Full-array block, constant index_map -> resident in VMEM, never re-DMA'd across steps.
    return pl.BlockSpec(shape, lambda i: tuple(0 for _ in shape))


def prepare_params(params):
    """One-time conversion: MXU-layer weights to bf16, everything else f32.
    Call once (outside the hot loop) and reuse the result for every forward."""
    return {
        "w1": params["w1"].astype(jnp.bfloat16),
        "w2": params["w2"].astype(jnp.bfloat16),
        "w3": params["w3"].astype(jnp.bfloat16),
        "w4": params["w4"].astype(jnp.float32),
        "b1": params["b1"].astype(jnp.float32),
        "b2": params["b2"].astype(jnp.float32),
        "b3": params["b3"].astype(jnp.float32),
        "b4": params["b4"].astype(jnp.float32),
    }


def ec_ann_forward(x, prepared_params, tile_b=2048):
    """x: (B, 7) float32.  prepared_params: output of prepare_params()."""
    B = x.shape[0]

    # Sublane-align the requested tile, then pick the batch tile.
    tile_b = max(8, _round_up(tile_b, 8))
    b8 = _round_up(B, 8)
    tb = min(tile_b, b8)
    # v7x megacore: keep >= 2 grid steps when the batch is big enough to matter, so the
    # "parallel" axis can shard across both TensorCores instead of serializing on one.
    if b8 <= tile_b and b8 >= 2048:
        tb = _round_up((b8 + 1) // 2, 8)

    B_pad = _round_up(B, tb)
    if B_pad != B:
        x = jnp.pad(x, ((0, B_pad - B), (0, 0)))

    w1, w2, w3, w4 = (prepared_params[k] for k in ("w1", "w2", "w3", "w4"))
    b1, b2, b3, b4 = (prepared_params[k] for k in ("b1", "b2", "b3", "b4"))

    grid = (B_pad // tb,)

    in_specs = [
        pl.BlockSpec((tb, 7), lambda i: (i, 0)),      # x: tiled over batch
        _const_spec(w1.shape), _const_spec(b1.shape),
        _const_spec(w2.shape), _const_spec(b2.shape),
        _const_spec(w3.shape), _const_spec(b3.shape),
        _const_spec(w4.shape), _const_spec(b4.shape),
    ]
    out_spec = pl.BlockSpec((tb, 6), lambda i: (i, 0))

    flops = 2 * B_pad * (7 * 128 + 128 * 128 + 128 * 6 + 6 * 6)
    weight_bytes = (7 * 128 + 128 * 128 + 128 * 6) * 2 + 6 * 6 * 4 + (128 + 128 + 6 + 6) * 4
    bytes_accessed = B_pad * (7 * 4 + 6 * 4) + weight_bytes

    out = pl.pallas_call(
        mlp_kernel,
        out_shape=jax.ShapeDtypeStruct((B_pad, 6), jnp.float32),
        grid=grid,
        in_specs=in_specs,
        out_specs=out_spec,
        compiler_params=pltpu.CompilerParams(
            dimension_semantics=("parallel",),
        ),
        cost_estimate=pl.CostEstimate(
            flops=flops, transcendentals=0, bytes_accessed=bytes_accessed),
    )(x, w1, b1, w2, b2, w3, b3, w4, b4)

    return out[:B]


def init_params(key):
    """Deterministic init mimicking nn.Linear's uniform(-1/sqrt(fan_in), 1/sqrt(fan_in)).
    Weights stored transposed vs. PyTorch: shape (in_features, out_features)."""
    dims = [(7, 128), (128, 128), (128, 6), (6, 6)]
    params = {}
    for idx, (fan_in, fan_out) in enumerate(dims, start=1):
        key, kw, kb = jax.random.split(key, 3)
        bound = 1.0 / jnp.sqrt(jnp.float32(fan_in))
        params[f"w{idx}"] = jax.random.uniform(
            kw, (fan_in, fan_out), jnp.float32, minval=-bound, maxval=bound)
        params[f"b{idx}"] = jax.random.uniform(
            kb, (1, fan_out), jnp.float32, minval=-bound, maxval=bound)
    return params


def reference_forward_f32(x, params):
    """Pure-f32 reference matching the PyTorch forward."""
    h = jnp.maximum(x @ params["w1"] + params["b1"], 0.0)
    h = jnp.maximum(h @ params["w2"] + params["b2"], 0.0)
    h = jnp.maximum(h @ params["w3"] + params["b3"], 0.0)
    return h @ params["w4"] + params["b4"]


def reference_forward_bf16(x, params):
    """Reference mirroring the kernel's bf16-operand / f32-accumulate matmul recipe."""
    bf = jnp.bfloat16
    h = jnp.maximum(
        jnp.dot(x.astype(bf), params["w1"].astype(bf),
                preferred_element_type=jnp.float32) + params["b1"], 0.0)
    h = jnp.maximum(
        jnp.dot(h.astype(bf), params["w2"].astype(bf),
                preferred_element_type=jnp.float32) + params["b2"], 0.0)
    h = jnp.maximum(
        jnp.dot(h.astype(bf), params["w3"].astype(bf),
                preferred_element_type=jnp.float32) + params["b3"], 0.0)
    return h @ params["w4"] + params["b4"]


# TODO(synk): train_model (KFold CV, Adam, CrossEntropyLoss, early stopping, checkpointing)
# is host-side training orchestration with no Pallas-kernel equivalent; only forward is ported.


if __name__ == "__main__":
    key = jax.random.PRNGKey(0)
    key, kx = jax.random.split(key)
    batch = 8
    x = jax.random.normal(kx, (batch, 7), jnp.float32)

    params = init_params(key)
    prepared = prepare_params(params)   # one-time bf16 weight conversion

    out = ec_ann_forward(x, prepared)
    out = jax.block_until_ready(out)
    assert out.shape == (batch, 6)

    # Primary check: same bf16-matmul / f32-accumulate recipe.
    ref_bf16 = reference_forward_bf16(x, params)
    assert jnp.allclose(out, ref_bf16, atol=1e-3, rtol=1e-3), \
        "mismatch vs bf16-matmul reference"

    # Sanity check: pure-f32 PyTorch-equivalent forward (loose tolerance for bf16 operands).
    ref_f32 = reference_forward_f32(x, params)
    assert jnp.allclose(out, ref_f32, atol=5e-2, rtol=5e-2), \
        "mismatch vs f32 reference"

    print("KERNEL_OK")
</pallas_src>

<mosaic_0001>
module attributes {stable_mosaic.version = 11 : i64} {
  func.func @mlp_kernel(%arg0: i32, %arg1: memref<8x7xf32, #tpu.memory_space<vmem>>, %arg2: memref<7x128xbf16, #tpu.memory_space<vmem>>, %arg3: memref<1x128xf32, #tpu.memory_space<vmem>>, %arg4: memref<128x128xbf16, #tpu.memory_space<vmem>>, %arg5: memref<1x128xf32, #tpu.memory_space<vmem>>, %arg6: memref<128x6xbf16, #tpu.memory_space<vmem>>, %arg7: memref<1x6xf32, #tpu.memory_space<vmem>>, %arg8: memref<6x6xf32, #tpu.memory_space<vmem>>, %arg9: memref<1x6xf32, #tpu.memory_space<vmem>>, %arg10: memref<8x6xf32, #tpu.memory_space<vmem>>) attributes {dimension_semantics = [#tpu.dimension_semantics<parallel>], iteration_bounds = array<i64: 1>, scalar_prefetch = 0 : i64, scratch_operands = 0 : i64, tpu.core_type = #tpu.core_type<tc>, window_params = [{transform_indices = @transform_0, window_bounds = array<i64: 8, 7>}, {pipeline_mode = #tpu.pipeline_mode<synchronous>, transform_indices = @transform_1, window_bounds = array<i64: 7, 128>}, {pipeline_mode = #tpu.pipeline_mode<synchronous>, transform_indices = @transform_2, window_bounds = array<i64: 1, 128>}, {pipeline_mode = #tpu.pipeline_mode<synchronous>, transform_indices = @transform_3, window_bounds = array<i64: 128, 128>}, {pipeline_mode = #tpu.pipeline_mode<synchronous>, transform_indices = @transform_4, window_bounds = array<i64: 1, 128>}, {pipeline_mode = #tpu.pipeline_mode<synchronous>, transform_indices = @transform_5, window_bounds = array<i64: 128, 6>}, {pipeline_mode = #tpu.pipeline_mode<synchronous>, transform_indices = @transform_6, window_bounds = array<i64: 1, 6>}, {pipeline_mode = #tpu.pipeline_mode<synchronous>, transform_indices = @transform_7, window_bounds = array<i64: 6, 6>}, {pipeline_mode = #tpu.pipeline_mode<synchronous>, transform_indices = @transform_8, window_bounds = array<i64: 1, 6>}, {transform_indices = @transform_9, window_bounds = array<i64: 8, 6>}]} {
    %c0 = arith.constant 0 : index
    %c0_0 = arith.constant 0 : index
    %0 = vector.load %arg1[%c0, %c0_0] : memref<8x7xf32, #tpu.memory_space<vmem>>, vector<8x7xf32>
    %1 = arith.truncf %0 : vector<8x7xf32> to vector<8x7xbf16>
    %c0_1 = arith.constant 0 : index
    %c0_2 = arith.constant 0 : index
    %2 = vector.load %arg2[%c0_1, %c0_2] : memref<7x128xbf16, #tpu.memory_space<vmem>>, vector<7x128xbf16>
    %cst = arith.constant dense<0.000000e+00> : vector<8x128xf32>
    %3 = tpu.matmul %1, %2, %cst {dimension_numbers = #tpu.dot_dimension_numbers<[1], [0], [0], [1], [0, 0, 1, 1], [], []>} : vector<8x7xbf16>, vector<7x128xbf16>, vector<8x128xf32> -> vector<8x128xf32>
    %c0_3 = arith.constant 0 : index
    %c0_4 = arith.constant 0 : index
    %4 = vector.load %arg3[%c0_3, %c0_4] : memref<1x128xf32, #tpu.memory_space<vmem>>, vector<1x128xf32>
    %5 = vector.broadcast %4 : vector<1x128xf32> to vector<8x128xf32>
    %6 = arith.addf %3, %5 : vector<8x128xf32>
    %cst_5 = arith.constant 0.000000e+00 : f32
    %7 = vector.broadcast %cst_5 : f32 to vector<8x128xf32>
    %8 = arith.maximumf %6, %7 : vector<8x128xf32>
    %9 = arith.truncf %8 : vector<8x128xf32> to vector<8x128xbf16>
    %c0_6 = arith.constant 0 : index
    %c0_7 = arith.constant 0 : index
    %10 = vector.load %arg4[%c0_6, %c0_7] : memref<128x128xbf16, #tpu.memory_space<vmem>>, vector<128x128xbf16>
    %cst_8 = arith.constant dense<0.000000e+00> : vector<8x128xf32>
    %11 = tpu.matmul %9, %10, %cst_8 {dimension_numbers = #tpu.dot_dimension_numbers<[1], [0], [0], [1], [0, 0, 1, 1], [], []>} : vector<8x128xbf16>, vector<128x128xbf16>, vector<8x128xf32> -> vector<8x128xf32>
    %c0_9 = arith.constant 0 : index
    %c0_10 = arith.constant 0 : index
    %12 = vector.load %arg5[%c0_9, %c0_10] : memref<1x128xf32, #tpu.memory_space<vmem>>, vector<1x128xf32>
    %13 = vector.broadcast %12 : vector<1x128xf32> to vector<8x128xf32>
    %14 = arith.addf %11, %13 : vector<8x128xf32>
    %cst_11 = arith.constant 0.000000e+00 : f32
    %15 = vector.broadcast %cst_11 : f32 to vector<8x128xf32>
    %16 = arith.maximumf %14, %15 : vector<8x128xf32>
    %17 = arith.truncf %16 : vector<8x128xf32> to vector<8x128xbf16>
    %c0_12 = arith.constant 0 : index
    %c0_13 = arith.constant 0 : index
    %18 = vector.load %arg6[%c0_12, %c0_13] : memref<128x6xbf16, #tpu.memory_space<vmem>>, vector<128x6xbf16>
    %cst_14 = arith.constant dense<0.000000e+00> : vector<8x6xf32>
    %19 = tpu.matmul %17, %18, %cst_14 {dimension_numbers = #tpu.dot_dimension_numbers<[1], [0], [0], [1], [0, 0, 1, 1], [], []>} : vector<8x128xbf16>, vector<128x6xbf16>, vector<8x6xf32> -> vector<8x6xf32>
    %c0_15 = arith.constant 0 : index
    %c0_16 = arith.constant 0 : index
    %20 = vector.load %arg7[%c0_15, %c0_16] : memref<1x6xf32, #tpu.memory_space<vmem>>, vector<1x6xf32>
    %21 = vector.broadcast %20 : vector<1x6xf32> to vector<8x6xf32>
    %22 = arith.addf %19, %21 : vector<8x6xf32>
    %cst_17 = arith.constant 0.000000e+00 : f32
    %23 = vector.broadcast %cst_17 : f32 to vector<8x6xf32>
    %24 = arith.maximumf %22, %23 : vector<8x6xf32>
    %c0_18 = arith.constant 0 : index
    %c0_19 = arith.constant 0 : index
    %25 = vector.load %arg8[%c0_18, %c0_19] : memref<6x6xf32, #tpu.memory_space<vmem>>, vector<6x6xf32>
    %26 = vector.extract_strided_slice %24 {offsets = [0, 0], sizes = [8, 1], strides = [1, 1]} : vector<8x6xf32> to vector<8x1xf32>
    %27 = vector.extract_strided_slice %25 {offsets = [0, 0], sizes = [1, 6], strides = [1, 1]} : vector<6x6xf32> to vector<1x6xf32>
    %28 = vector.broadcast %26 : vector<8x1xf32> to vector<8x6xf32>
    %29 = vector.broadcast %27 : vector<1x6xf32> to vector<8x6xf32>
    %30 = arith.mulf %28, %29 : vector<8x6xf32>
    %31 = vector.extract_strided_slice %24 {offsets = [0, 1], sizes = [8, 1], strides = [1, 1]} : vector<8x6xf32> to vector<8x1xf32>
    %32 = vector.extract_strided_slice %25 {offsets = [1, 0], sizes = [1, 6], strides = [1, 1]} : vector<6x6xf32> to vector<1x6xf32>
    %33 = vector.broadcast %31 : vector<8x1xf32> to vector<8x6xf32>
    %34 = vector.broadcast %32 : vector<1x6xf32> to vector<8x6xf32>
    %35 = arith.mulf %33, %34 : vector<8x6xf32>
    %36 = vector.extract_strided_slice %24 {offsets = [0, 2], sizes = [8, 1], strides = [1, 1]} : vector<8x6xf32> to vector<8x1xf32>
    %37 = vector.extract_strided_slice %25 {offsets = [2, 0], sizes = [1, 6], strides = [1, 1]} : vector<6x6xf32> to vector<1x6xf32>
    %38 = vector.broadcast %36 : vector<8x1xf32> to vector<8x6xf32>
    %39 = vector.broadcast %37 : vector<1x6xf32> to vector<8x6xf32>
    %40 = arith.mulf %38, %39 : vector<8x6xf32>
    %41 = vector.extract_strided_slice %24 {offsets = [0, 3], sizes = [8, 1], strides = [1, 1]} : vector<8x6xf32> to vector<8x1xf32>
    %42 = vector.extract_strided_slice %25 {offsets = [3, 0], sizes = [1, 6], strides = [1, 1]} : vector<6x6xf32> to vector<1x6xf32>
    %43 = vector.broadcast %41 : vector<8x1xf32> to vector<8x6xf32>
    %44 = vector.broadcast %42 : vector<1x6xf32> to vector<8x6xf32>
    %45 = arith.mulf %43, %44 : vector<8x6xf32>
    %46 = vector.extract_strided_slice %24 {offsets = [0, 4], sizes = [8, 1], strides = [1, 1]} : vector<8x6xf32> to vector<8x1xf32>
    %47 = vector.extract_strided_slice %25 {offsets = [4, 0], sizes = [1, 6], strides = [1, 1]} : vector<6x6xf32> to vector<1x6xf32>
    %48 = vector.broadcast %46 : vector<8x1xf32> to vector<8x6xf32>
    %49 = vector.broadcast %47 : vector<1x6xf32> to vector<8x6xf32>
    %50 = arith.mulf %48, %49 : vector<8x6xf32>
    %51 = vector.extract_strided_slice %24 {offsets = [0, 5], sizes = [8, 1], strides = [1, 1]} : vector<8x6xf32> to vector<8x1xf32>
    %52 = vector.extract_strided_slice %25 {offsets = [5, 0], sizes = [1, 6], strides = [1, 1]} : vector<6x6xf32> to vector<1x6xf32>
    %53 = vector.broadcast %51 : vector<8x1xf32> to vector<8x6xf32>
    %54 = vector.broadcast %52 : vector<1x6xf32> to vector<8x6xf32>
    %55 = arith.mulf %53, %54 : vector<8x6xf32>
    %56 = arith.addf %30, %35 : vector<8x6xf32>
    %57 = arith.addf %40, %45 : vector<8x6xf32>
    %58 = arith.addf %56, %57 : vector<8x6xf32>
    %59 = arith.addf %50, %55 : vector<8x6xf32>
    %c0_20 = arith.constant 0 : index
    %c0_21 = arith.constant 0 : index
    %60 = vector.load %arg9[%c0_20, %c0_21] : memref<1x6xf32, #tpu.memory_space<vmem>>, vector<1x6xf32>
    %61 = vector.broadcast %60 : vector<1x6xf32> to vector<8x6xf32>
    %62 = arith.addf %59, %61 : vector<8x6xf32>
    %63 = arith.addf %58, %62 : vector<8x6xf32>
    %c0_22 = arith.constant 0 : index
    %c0_23 = arith.constant 0 : index
    %64 = vector.load %arg10[%c0_22, %c0_23] : memref<8x6xf32, #tpu.memory_space<vmem>>, vector<8x6xf32>
    tpu.vector_store %arg10[%c0_22, %c0_23], %63 {strides = array<i32>} : memref<8x6xf32, #tpu.memory_space<vmem>>, vector<8x6xf32>,
    return
  }
  func.func @transform_0(%arg0: i32) -> (i32, i32) {
    %c0_i32 = arith.constant 0 : i32
    %c0_i32_0 = arith.constant 0 : i32
    return %arg0, %c0_i32 : i32, i32
  }
  func.func @transform_1(%arg0: i32) -> (i32, i32) {
    %c0_i32 = arith.constant 0 : i32
    %c0_i32_0 = arith.constant 0 : i32
    %c0_i32_1 = arith.constant 0 : i32
    return %c0_i32, %c0_i32_0 : i32, i32
  }
  func.func @transform_2(%arg0: i32) -> (i32, i32) {
    %c0_i32 = arith.constant 0 : i32
    %c0_i32_0 = arith.constant 0 : i32
    %c0_i32_1 = arith.constant 0 : i32
    return %c0_i32, %c0_i32_0 : i32, i32
  }
  func.func @transform_3(%arg0: i32) -> (i32, i32) {
    %c0_i32 = arith.constant 0 : i32
    %c0_i32_0 = arith.constant 0 : i32
    %c0_i32_1 = arith.constant 0 : i32
    return %c0_i32, %c0_i32_0 : i32, i32
  }
  func.func @transform_4(%arg0: i32) -> (i32, i32) {
    %c0_i32 = arith.constant 0 : i32
    %c0_i32_0 = arith.constant 0 : i32
    %c0_i32_1 = arith.constant 0 : i32
    return %c0_i32, %c0_i32_0 : i32, i32
  }
  func.func @transform_5(%arg0: i32) -> (i32, i32) {
    %c0_i32 = arith.constant 0 : i32
    %c0_i32_0 = arith.constant 0 : i32
    %c0_i32_1 = arith.constant 0 : i32
    return %c0_i32, %c0_i32_0 : i32, i32
  }
  func.func @transform_6(%arg0: i32) -> (i32, i32) {
    %c0_i32 = arith.constant 0 : i32
    %c0_i32_0 = arith.constant 0 : i32
    %c0_i32_1 = arith.constant 0 : i32
    return %c0_i32, %c0_i32_0 : i32, i32
  }
  func.func @transform_7(%arg0: i32) -> (i32, i32) {
    %c0_i32 = arith.constant 0 : i32
    %c0_i32_0 = arith.constant 0 : i32
    %c0_i32_1 = arith.constant 0 : i32
    return %c0_i32, %c0_i32_0 : i32, i32
  }
  func.func @transform_8(%arg0: i32) -> (i32, i32) {
    %c0_i32 = arith.constant 0 : i32
    %c0_i32_0 = arith.constant 0 : i32
    %c0_i32_1 = arith.constant 0 : i32
    return %c0_i32, %c0_i32_0 : i32, i32
  }
  func.func @transform_9(%arg0: i32) -> (i32, i32) {
    %c0_i32 = arith.constant 0 : i32
    %c0_i32_0 = arith.constant 0 : i32
    return %arg0, %c0_i32 : i32, i32
  }
}

</mosaic_0001>

<llo_original>
// kernel: tpu_custom_call.1
$region0: #{tpu_custom_call.1}
  #allocation0 [shape = 'u32[]', space=smem, size = 0x4, offset = 0x4, fixed_abs, tag = 'smem constant byte address 0x4 - core index']
  #allocation1 [shape = 'u32[144,128]{1,0:T(1,128)}', space=vmem, size = 0x12000, scoped, tag = 'internal scratch']
  %s0 = inlined_call_operand.vmem [shape: f32[8,7], index: 0, kind: input, shape index: {}]
  %s1 = inlined_call_operand.hbm [shape: bf16[7,128], index: 1, kind: input, shape index: {}]
  %s2 = inlined_call_operand.vmem [shape: f32[1,128], index: 2, kind: input, shape index: {}]
  %s3 = inlined_call_operand.vmem [shape: bf16[128,128], index: 3, kind: input, shape index: {}]
  %s4 = inlined_call_operand.vmem [shape: f32[1,128], index: 4, kind: input, shape index: {}]
  %s5 = inlined_call_operand.vmem [shape: bf16[128,6], index: 5, kind: input, shape index: {}]
  %s6 = inlined_call_operand.vmem [shape: f32[1,6], index: 6, kind: input, shape index: {}]
  %s7 = inlined_call_operand.vmem [shape: f32[6,6], index: 7, kind: input, shape index: {}]
  %s8 = inlined_call_operand.vmem [shape: f32[1,6], index: 8, kind: input, shape index: {}]
  %s9 = inlined_call_operand.hbm [shape: f32[8,6], index: 9, kind: output, shape index: {}]
  %s10 = sld [smem:[#allocation0]]
  $region50: #{tpu_custom_call.1} parent=0
    _
  %s12 = ssub.s32 1, %s10
  %s13 = scalar_select 0, %s12, %s10
  $region1: #{tpu_custom_call.1} parent=0
    #allocation2 [shape = 'u8[2048]{0}', space=vmem, size = 0x800, scoped, tag = 'input window, operand 1, single buffered']
    #allocation3 [shape = 's32[1]{0}', space=sflag, size = 0x4, scoped, tag = 'scoped memory for tpu_custom_call.1']
    #allocation4 [shape = 's32[1]{0}', space=sflag, size = 0x4, scoped, tag = 'scoped memory for tpu_custom_call.1']
    #allocation5 [shape = 'u8[4096]{0}', space=vmem, size = 0x1000, scoped, tag = 'output window, operand 0, single buffered']
    %14 = vsyncpa [#allocation3], 0
    %15 = vsyncpa [#allocation4], 0
    // Predicated region
    $region2: #{tpu_custom_call.1} parent=1 // pred_check
      _
    $region3: #{tpu_custom_call.1} parent=1 // pred_check_branch
      %17 = sbr.rel (0) target = $region5
    $region4: #{tpu_custom_call.1} parent=1 // pred_region
      _
    $region5: #{tpu_custom_call.1} parent=1 // pred_fallthru
      _
    // Predicated region
    $region6: #{tpu_custom_call.1} parent=1 // pred_check
      _
    $region7: #{tpu_custom_call.1} parent=1 // pred_check_branch
      %19 = sbr.rel (0) target = $region9
    $region8: #{tpu_custom_call.1} parent=1 // pred_region
      %s21 = ssub.s32 64, 64
      %22 = vsyncadd [#allocation3], %s21
      %s24 = sshll.u32 [#allocation2], 4
      %s25 = int_to_ptr.vmem [resolvable:$true] %s24
      %27 = dma.hbm_to_vmem [thread:$0]  %s1, 64, %s25, [#allocation3]
    $region9: #{tpu_custom_call.1} parent=1 // pred_fallthru
      _
    // Predicated region
    $region10: #{tpu_custom_call.1} parent=1 // pred_check
      _
    $region11: #{tpu_custom_call.1} parent=1 // pred_check_branch
      %29 = sbr.rel (0) target = $region13
    $region12: #{tpu_custom_call.1} parent=1 // pred_region
      _
    $region13: #{tpu_custom_call.1} parent=1 // pred_fallthru
      _
    // Predicated region
    $region14: #{tpu_custom_call.1} parent=1 // pred_check
      _
    $region15: #{tpu_custom_call.1} parent=1 // pred_check_branch
      %31 = sbr.rel (0) target = $region17
    $region16: #{tpu_custom_call.1} parent=1 // pred_region
      _
    $region17: #{tpu_custom_call.1} parent=1 // pred_fallthru
      _
    // Predicated region
    $region18: #{tpu_custom_call.1} parent=1 // pred_check
      _
    $region19: #{tpu_custom_call.1} parent=1 // pred_check_branch
      %33 = sbr.rel (0) target = $region21
    $region20: #{tpu_custom_call.1} parent=1 // pred_region
      _
    $region21: #{tpu_custom_call.1} parent=1 // pred_fallthru
      _
    // Predicated region
    $region22: #{tpu_custom_call.1} parent=1 // pred_check
      _
    $region23: #{tpu_custom_call.1} parent=1 // pred_check_branch
      %35 = sbr.rel (0) target = $region25
    $region24: #{tpu_custom_call.1} parent=1 // pred_region
      _
    $region25: #{tpu_custom_call.1} parent=1 // pred_fallthru
      _
    // Predicated region
    $region26: #{tpu_custom_call.1} parent=1 // pred_check
      _
    $region27: #{tpu_custom_call.1} parent=1 // pred_check_branch
      %37 = sbr.rel (0) target = $region29
    $region28: #{tpu_custom_call.1} parent=1 // pred_region
      _
    $region29: #{tpu_custom_call.1} parent=1 // pred_fallthru
      _
    // Predicated region
    $region30: #{tpu_custom_call.1} parent=1 // pred_check
      _
    $region31: #{tpu_custom_call.1} parent=1 // pred_check_branch
      %39 = sbr.rel (0) target = $region33
    $region32: #{tpu_custom_call.1} parent=1 // pred_region
      _
    $region33: #{tpu_custom_call.1} parent=1 // pred_fallthru
      _
    // Predicated region
    $region34: #{tpu_custom_call.1} parent=1 // pred_check
      _
    $region35: #{tpu_custom_call.1} parent=1 // pred_check_branch
      %41 = sbr.rel (0) target = $region37
    $region36: #{tpu_custom_call.1} parent=1 // pred_region
      _
    $region37: #{tpu_custom_call.1} parent=1 // pred_fallthru
      _
    // Predicated region
    $region38: #{tpu_custom_call.1} parent=1 // pred_check
      _
    $region39: #{tpu_custom_call.1} parent=1 // pred_check_branch
      %43 = sbr.rel (0) target = $region41
    $region40: #{tpu_custom_call.1} parent=1 // pred_region
      %44 = dma.done [#allocation3], 64
    $region41: #{tpu_custom_call.1} parent=1 // pred_fallthru
      _
    %v46 = vld [vmem:[%s0] sm:$0xff]
    %v47 = vpack.c.bf16 %v46, %v46
    %v48 = vld [vmem:[#allocation2] sm:$0xf]
    %v49 = vld [vmem:[%s2] sm:$0x1]
    %v51 = vlaneseq
    %v52 = vshrl.u32 %v51, 7
    %v53 = vsub.s32 0, %v52
    %v54 = vrot.slane %v49, %v53
    %vm56 = vcmask 56320
    %v58 = vsel %vm56, %v47, 0
    %vm60 = vcmask 1042432
    %vm61 = vcmask 1043456
    %v62 = vsel %vm60, 4294967295, 65535
    %v63 = vsel %vm61, %v62, 0
    %v65 = vand.u32 %v48, %v63
    %67 = vmatprep.subr.bf16.mxu0 0
    %68 = vmatpush1.bf16.msra.mxu0 %v65
    %69 = vmatprep.subr.bf16.mxu0 0
    %70 = vmatpush1.bf16.msra.mxu0 0
    %71 = vmatprep.subr.bf16.mxu0 0
    %72 = vmatpush1.bf16.msra.mxu0 0
    %73 = vmatprep.subr.bf16.mxu0 0
    %74 = vmatpush1.bf16.msra.mxu0 0
    %75 = vmatprep.subr.bf16.mxu0 0
    %76 = vmatpush1.bf16.msra.mxu0 0
    %77 = vmatprep.subr.bf16.mxu0 0
    %78 = vmatpush1.bf16.msra.mxu0 0
    %79 = vmatprep.subr.bf16.mxu0 0
    %80 = vmatpush1.bf16.msra.mxu0 0
    %81 = vmatprep.subr.bf16.mxu0 0
    %82 = vmatpush1.bf16.msra.mxu0 0
    %83 = vmatprep.subr.bf16.mxu0 0
    %84 = vmatpush1.bf16.msra.mxu0 0
    %85 = vmatprep.subr.bf16.mxu0 0
    %86 = vmatpush1.bf16.msra.mxu0 0
    %87 = vmatprep.subr.bf16.mxu0 0
    %88 = vmatpush1.bf16.msra.mxu0 0
    %89 = vmatprep.subr.bf16.mxu0 0
    %90 = vmatpush1.bf16.msra.mxu0 0
    %91 = vmatprep.subr.bf16.mxu0 0
    %92 = vmatpush1.bf16.msra.mxu0 0
    %93 = vmatprep.subr.bf16.mxu0 0
    %94 = vmatpush1.bf16.msra.mxu0 0
    %95 = vmatprep.subr.bf16.mxu0 0
    %96 = vmatpush1.bf16.msra.mxu0 0
    %97 = vmatprep.subr.bf16.mxu0 0
    %98 = vmatpush1.bf16.msra.mxu0 0
    %99 = vmatprep.mubr.bf16.mxu0 0
    %100 = vmatmul.mubr.bf16.gmra.mrb[0].mxu0 %v58
    %v101 = vpop.f32.mrb[0].mxu0
    %v102 = vadd.f32 %v54, %v101
    %v103 = vpop.f32.mrb[0].mxu0
    %v104 = vpop.f32.mrb[0].mxu0
    %v105 = vpop.f32.mrb[0].mxu0
    %106 = vdwg.mxu0
    %v107 = vmax.f32 %v102, 0.0
    %v108 = vpack.c.bf16 %v107, %v107
    %v109 = vld [vmem:[%s3] sm:$0xf]
    %v110 = vld [vmem:[%s3 + $0x4] sm:$0xf]
    %v111 = vld [vmem:[%s3 + $0x8] sm:$0xf]
    %v112 = vld [vmem:[%s3 + $0xc] sm:$0xf]
    %v113 = vld [vmem:[%s3 + $0x10] sm:$0xf]
    %v114 = vld [vmem:[%s3 + $0x14] sm:$0xf]
    %v115 = vld [vmem:[%s3 + $0x18] sm:$0xf]
    %v116 = vld [vmem:[%s3 + $0x1c] sm:$0xf]
    %v117 = vld [vmem:[%s3 + $0x20] sm:$0xf]
    %v118 = vld [vmem:[%s3 + $0x24] sm:$0xf]
    %v119 = vld [vmem:[%s3 + $0x28] sm:$0xf]
    %v120 = vld [vmem:[%s3 + $0x2c] sm:$0xf]
    %v121 = vld [vmem:[%s3 + $0x30] sm:$0xf]
    %v122 = vld [vmem:[%s3 + $0x34] sm:$0xf]
    %v123 = vld [vmem:[%s3 + $0x38] sm:$0xf]
    %v124 = vld [vmem:[%s3 + $0x3c] sm:$0xf]
    %v125 = vld [vmem:[%s4] sm:$0x1]
    %v127 = vlaneseq
    %v128 = vshrl.u32 %v127, 7
    %v129 = vsub.s32 0, %v128
    %v130 = vrot.slane %v125, %v129
    %v148 = vunpack.c.l.b16 %v109
    %v149 = vunpack.c.l.b16 %v110
    %v150 = vunpack.c.l.b16 %v111
    %v151 = vunpack.c.l.b16 %v112
    %v152 = vunpack.c.l.b16 %v113
    %v153 = vunpack.c.l.b16 %v114
    %v154 = vunpack.c.l.b16 %v115
    %v155 = vunpack.c.l.b16 %v116
    %v156 = vunpack.c.l.b16 %v117
    %v157 = vunpack.c.l.b16 %v118
    %v158 = vunpack.c.l.b16 %v119
    %v159 = vunpack.c.l.b16 %v120
    %v160 = vunpack.c.l.b16 %v121
    %v161 = vunpack.c.l.b16 %v122
    %v162 = vunpack.c.l.b16 %v123
    %v163 = vunpack.c.l.b16 %v124
    %v164 = vpack.c.b16 %v149, %v148
    %v165 = vpack.c.b16 %v151, %v150
    %v166 = vpack.c.b16 %v153, %v152
    %v167 = vpack.c.b16 %v155, %v154
    %v168 = vpack.c.b16 %v157, %v156
    %v169 = vpack.c.b16 %v159, %v158
    %v170 = vpack.c.b16 %v161, %v160
    %v171 = vpack.c.b16 %v163, %v162
    %180 = vmatprep.subr.bf16.mxu0 0
    %181 = vmatpush1.bf16.msra.mxu0 %v164
    %182 = vmatprep.subr.bf16.mxu0 0
    %183 = vmatpush1.bf16.msra.mxu0 %v165
    %184 = vmatprep.subr.bf16.mxu0 0
    %185 = vmatpush1.bf16.msra.mxu0 %v166
    %186 = vmatprep.subr.bf16.mxu0 0
    %187 = vmatpush1.bf16.msra.mxu0 %v167
    %188 = vmatprep.subr.bf16.mxu0 0
    %189 = vmatpush1.bf16.msra.mxu0 %v168
    %190 = vmatprep.subr.bf16.mxu0 0
    %191 = vmatpush1.bf16.msra.mxu0 %v169
    %192 = vmatprep.subr.bf16.mxu0 0
    %193 = vmatpush1.bf16.msra.mxu0 %v170
    %194 = vmatprep.subr.bf16.mxu0 0
    %195 = vmatpush1.bf16.msra.mxu0 %v171
    %196 = vmatprep.subr.bf16.mxu0 0
    %197 = vmatpush1.bf16.msra.mxu0 0
    %198 = vmatprep.subr.bf16.mxu0 0
    %199 = vmatpush1.bf16.msra.mxu0 0
    %200 = vmatprep.subr.bf16.mxu0 0
    %201 = vmatpush1.bf16.msra.mxu0 0
    %202 = vmatprep.subr.bf16.mxu0 0
    %203 = vmatpush1.bf16.msra.mxu0 0
    %204 = vmatprep.subr.bf16.mxu0 0
    %205 = vmatpush1.bf16.msra.mxu0 0
    %206 = vmatprep.subr.bf16.mxu0 0
    %207 = vmatpush1.bf16.msra.mxu0 0
    %208 = vmatprep.subr.bf16.mxu0 0
    %209 = vmatpush1.bf16.msra.mxu0 0
    %210 = vmatprep.subr.bf16.mxu0 0
    %211 = vmatpush1.bf16.msra.mxu0 0
    %212 = vmatprep.mubr.bf16.mxu0 0
    %213 = vmatmul.mubr.bf16.gmra.mrb[0].mxu0 %v108
    %v214 = vpop.f32.mrb[0].mxu0
    %v215 = vadd.f32 %v130, %v214
    %v216 = vpop.f32.mrb[0].mxu0
    %v217 = vpop.f32.mrb[0].mxu0
    %v218 = vpop.f32.mrb[0].mxu0
    %219 = vdwg.mxu0
    %v220 = vmax.f32 %v215, 0.0
    %v221 = vpack.c.bf16 %v220, %v220
    %v222 = vld [vmem:[%s5] sm:$0xf]
    %v223 = vld [vmem:[%s5 + $0x4] sm:$0xf]
    %v224 = vld [vmem:[%s5 + $0x8] sm:$0xf]
    %v225 = vld [vmem:[%s5 + $0xc] sm:$0xf]
    %v226 = vld [vmem:[%s5 + $0x10] sm:$0xf]
    %v227 = vld [vmem:[%s5 + $0x14] sm:$0xf]
    %v228 = vld [vmem:[%s5 + $0x18] sm:$0xf]
    %v229 = vld [vmem:[%s5 + $0x1c] sm:$0xf]
    %v230 = vld [vmem:[%s5 + $0x20] sm:$0xf]
    %v231 = vld [vmem:[%s5 + $0x24] sm:$0xf]
    %v232 = vld [vmem:[%s5 + $0x28] sm:$0xf]
    %v233 = vld [vmem:[%s5 + $0x2c] sm:$0xf]
    %v234 = vld [vmem:[%s5 + $0x30] sm:$0xf]
    %v235 = vld [vmem:[%s5 + $0x34] sm:$0xf]
    %v236 = vld [vmem:[%s5 + $0x38] sm:$0xf]
    %v237 = vld [vmem:[%s5 + $0x3c] sm:$0xf]
    %v238 = vld [vmem:[%s6] sm:$0x1]
    %v240 = vlaneseq
    %v241 = vshrl.u32 %v240, 7
    %v242 = vsub.s32 0, %v241
    %v243 = vrot.slane %v238, %v242
    %v261 = vunpack.c.l.b16 %v222
    %v262 = vunpack.c.l.b16 %v223
    %v263 = vunpack.c.l.b16 %v224
    %v264 = vunpack.c.l.b16 %v225
    %v265 = vunpack.c.l.b16 %v226
    %v266 = vunpack.c.l.b16 %v227
    %v267 = vunpack.c.l.b16 %v228
    %v268 = vunpack.c.l.b16 %v229
    %v269 = vunpack.c.l.b16 %v230
    %v270 = vunpack.c.l.b16 %v231
    %v271 = vunpack.c.l.b16 %v232
    %v272 = vunpack.c.l.b16 %v233
    %v273 = vunpack.c.l.b16 %v234
    %v274 = vunpack.c.l.b16 %v235
    %v275 = vunpack.c.l.b16 %v236
    %v276 = vunpack.c.l.b16 %v237
    %v277 = vpack.c.b16 %v262, %v261
    %v278 = vpack.c.b16 %v264, %v263
    %v279 = vpack.c.b16 %v266, %v265
    %v280 = vpack.c.b16 %v268, %v267
    %v281 = vpack.c.b16 %v270, %v269
    %v282 = vpack.c.b16 %v272, %v271
    %v283 = vpack.c.b16 %v274, %v273
    %v284 = vpack.c.b16 %v276, %v275
    %293 = vmatprep.subr.bf16.mxu0 0
    %294 = vmatpush1.bf16.msra.mxu0 %v277
    %295 = vmatprep.subr.bf16.mxu0 0
    %296 = vmatpush1.bf16.msra.mxu0 %v278
    %297 = vmatprep.subr.bf16.mxu0 0
    %298 = vmatpush1.bf16.msra.mxu0 %v279
    %299 = vmatprep.subr.bf16.mxu0 0
    %300 = vmatpush1.bf16.msra.mxu0 %v280
    %301 = vmatprep.subr.bf16.mxu0 0
    %302 = vmatpush1.bf16.msra.mxu0 %v281
    %303 = vmatprep.subr.bf16.mxu0 0
    %304 = vmatpush1.bf16.msra.mxu0 %v282
    %305 = vmatprep.subr.bf16.mxu0 0
    %306 = vmatpush1.bf16.msra.mxu0 %v283
    %307 = vmatprep.subr.bf16.mxu0 0
    %308 = vmatpush1.bf16.msra.mxu0 %v284
    %309 = vmatprep.subr.bf16.mxu0 0
    %310 = vmatpush1.bf16.msra.mxu0 0
    %311 = vmatprep.subr.bf16.mxu0 0
    %312 = vmatpush1.bf16.msra.mxu0 0
    %313 = vmatprep.subr.bf16.mxu0 0
    %314 = vmatpush1.bf16.msra.mxu0 0
    %315 = vmatprep.subr.bf16.mxu0 0
    %316 = vmatpush1.bf16.msra.mxu0 0
    %317 = vmatprep.subr.bf16.mxu0 0
    %318 = vmatpush1.bf16.msra.mxu0 0
    %319 = vmatprep.subr.bf16.mxu0 0
    %320 = vmatpush1.bf16.msra.mxu0 0
    %321 = vmatprep.subr.bf16.mxu0 0
    %322 = vmatpush1.bf16.msra.mxu0 0
    %323 = vmatprep.subr.bf16.mxu0 0
    %324 = vmatpush1.bf16.msra.mxu0 0
    %325 = vmatprep.mubr.bf16.mxu0 0
    %326 = vmatmul.mubr.bf16.gmra.mrb[0].mxu0 %v221
    %v327 = vpop.f32.mrb[0].mxu0
    %v328 = vadd.f32 %v243, %v327
    %v329 = vpop.f32.mrb[0].mxu0
    %v330 = vpop.f32.mrb[0].mxu0
    %v331 = vpop.f32.mrb[0].mxu0
    %332 = vdwg.mxu0
    %v333 = vmax.f32 %v328, 0.0
    %v334 = vld [vmem:[%s7] sm:$0x3f]
    %336 = vset.pattern.permute.xlu0 0
    %337 = vperm.xlu0 %336, %v333
    %v338 = vpop.permute.xlu0 %337
    %v340 = vlaneseq
    %v341 = vshrl.u32 %v340, 7
    %v342 = vsub.s32 0, %v341
    %v343 = vrot.slane %v334, %v342
    %v344 = vmul.f32 %v338, %v343
    %345 = vset.pattern.permute.xlu0 1
    %346 = vperm.xlu0 %345, %v333
    %v347 = vpop.permute.xlu0 %346
    %v349 = vlaneseq
    %v350 = vshrl.u32 %v349, 7
    %v351 = vsub.s32 1, %v350
    %v352 = vrot.slane %v334, %v351
    %v353 = vmul.f32 %v347, %v352
    %354 = vset.pattern.permute.xlu0 2
    %355 = vperm.xlu0 %354, %v333
    %v356 = vpop.permute.xlu0 %355
    %v358 = vlaneseq
    %v359 = vshrl.u32 %v358, 7
    %v360 = vsub.s32 2, %v359
    %v361 = vrot.slane %v334, %v360
    %v362 = vmul.f32 %v356, %v361
    %363 = vset.pattern.permute.xlu0 3
    %364 = vperm.xlu0 %363, %v333
    %v365 = vpop.permute.xlu0 %364
    %v367 = vlaneseq
    %v368 = vshrl.u32 %v367, 7
    %v369 = vsub.s32 3, %v368
    %v370 = vrot.slane %v334, %v369
    %v371 = vmul.f32 %v365, %v370
    %372 = vset.pattern.permute.xlu0 4
    %373 = vperm.xlu0 %372, %v333
    %v374 = vpop.permute.xlu0 %373
    %v376 = vlaneseq
    %v377 = vshrl.u32 %v376, 7
    %v378 = vsub.s32 4, %v377
    %v379 = vrot.slane %v334, %v378
    %v380 = vmul.f32 %v374, %v379
    %381 = vset.pattern.permute.xlu0 5
    %382 = vperm.xlu0 %381, %v333
    %v383 = vpop.permute.xlu0 %382
    %v385 = vlaneseq
    %v386 = vshrl.u32 %v385, 7
    %v387 = vsub.s32 5, %v386
    %v388 = vrot.slane %v334, %v387
    %v389 = vmul.f32 %v383, %v388
    %v390 = vadd.f32 %v344, %v353
    %v391 = vadd.f32 %v362, %v371
    %v392 = vadd.f32 %v390, %v391
    %v393 = vadd.f32 %v380, %v389
    %v394 = vld [vmem:[%s8] sm:$0x1]
    %v396 = vlaneseq
    %v397 = vshrl.u32 %v396, 7
    %v398 = vsub.s32 0, %v397
    %v399 = vrot.slane %v394, %v398
    %v401 = vadd.f32 %v393, %v399
    %v402 = vadd.f32 %v392, %v401
    %vm403 = vcmask 48128
    %404 = vst.msk [vmem:[#allocation5] sm:$0xff] %vm403, %v402
    // Predicated region
    $region42: #{tpu_custom_call.1} parent=1 // pred_check
      _
    $region43: #{tpu_custom_call.1} parent=1 // pred_check_branch
      %406 = sbr.rel (0) target = $region45
    $region44: #{tpu_custom_call.1} parent=1 // pred_region
      %s408 = ssub.s32 128, 128
      %409 = vsyncadd [#allocation4], %s408
      %s411 = sshll.u32 [#allocation5], 4
      %s412 = int_to_ptr.vmem [resolvable:$true] %s411
      %414 = dma.vmem_to_hbm [thread:$0]  %s412, 128, %s9, [#allocation4]
    $region45: #{tpu_custom_call.1} parent=1 // pred_fallthru
      _
    // Predicated region
    $region46: #{tpu_custom_call.1} parent=1 // pred_check
      _
    $region47: #{tpu_custom_call.1} parent=1 // pred_check_branch
      %416 = sbr.rel (0) target = $region49
    $region48: #{tpu_custom_call.1} parent=1 // pred_region
      %417 = dma.done [#allocation4], 128
    $region49: #{tpu_custom_call.1} parent=1 // pred_fallthru
      _
    %418 = vsyncpa [#allocation3], 1
    %419 = vsyncpa [#allocation4], 1

</llo_original>
